<compile_context>
chip_gen: v7x
topology: tpu7x:2x2x1
jax: 0.10.0
libtpu: 0.0.40
codegen_flags: <defaults>
</compile_context>

<pallas_src>
import functools

import jax
import jax.numpy as jnp
from jax.experimental import pallas as pl
from jax.experimental.pallas import tpu as pltpu


def _fused_sccf_kernel(adj_ref, scale_ref, ego_ref, z0_ref, out_ref,
                       x_scr, acc_scr, y_scr, *, inv_layers):
    """One fused kernel for all propagation layers.

    adj_ref   : (tile_m, tile_k) int8   binary adjacency block A[i, k]
    scale_ref : (tile_m, 1)      f32    d^-1/2 for the rows of tile i
    ego_ref   : (tile_m, D)      f32    layer-0 embeddings (rows of tile i)
    z0_ref    : (tile_k, D)      bf16   pre-scaled layer-0 embeddings (rows of tile k)
    out_ref   : (tile_m, D)      f32    final mean (written at the last layer only)
    x_scr     : (2*N, D)         bf16   ping-pong pre-scaled propagated embeddings
    acc_scr   : (N, D)           f32    running layer sum
    y_scr     : (tile_m, D)      f32    K accumulator for the current (layer, i)
    """
    l = pl.program_id(0)            # layer
    i = pl.program_id(1)            # output-row tile
    k = pl.program_id(2)            # contraction tile
    n_k = pl.num_programs(2)
    n_layers = pl.num_programs(0)

    tile_m, tile_k = adj_ref.shape
    n_total = x_scr.shape[0] // 2   # padded node count (static)

    # ---- one-time staging of the pre-scaled bf16 ego into ping-pong slot 0 ----
    @pl.when((l == 0) & (i == 0))
    def _():
        off = pl.multiple_of(k * tile_k, tile_k)
        x_scr[pl.ds(off, tile_k), :] = z0_ref[...]

    # ---- running layer-sum init: acc[rows i] = ego (exact f32 layer-0 term) ----
    @pl.when((l == 0) & (k == 0))
    def _():
        row_off = pl.multiple_of(i * tile_m, tile_m)
        acc_scr[pl.ds(row_off, tile_m), :] = ego_ref[...]

    # ---- K-accumulator init for this (layer, row-tile) ----
    @pl.when(k == 0)
    def _():
        y_scr[...] = jnp.zeros_like(y_scr)

    # ---- y_i += A_bin[i, k] @ z[k]   (int8 stream -> bf16 MXU, f32 accumulate) ----
    a_blk = adj_ref[...].astype(jnp.bfloat16)                 # 0/1, exact in bf16
    read_off = pl.multiple_of((l % 2) * n_total + k * tile_k, tile_k)
    z_blk = x_scr[pl.ds(read_off, tile_k), :]
    y_scr[...] += jnp.dot(a_blk, z_blk, preferred_element_type=jnp.float32)

    # ---- finalize this (layer, row-tile) ----
    # NOTE: y_scr is kept (instead of accumulating into out_ref) because the
    # output index_map is frozen for l < L-1 to get a single HBM writeback.
    @pl.when(k == n_k - 1)
    def _():
        sv = scale_ref[...]                      # (tile_m, 1) row scale d^-1/2
        ego_next = sv * y_scr[...]               # this layer's output rows (f32)
        row_off = pl.multiple_of(i * tile_m, tile_m)
        new_acc = acc_scr[pl.ds(row_off, tile_m), :] + ego_next
        acc_scr[pl.ds(row_off, tile_m), :] = new_acc
        # Next layer's pre-scaled bf16 input: z_{l+1} = s * ego_{l+1}.
        write_off = pl.multiple_of(((l + 1) % 2) * n_total + i * tile_m, tile_m)
        x_scr[pl.ds(write_off, tile_m), :] = (sv * ego_next).astype(x_scr.dtype)

        # Single HBM writeback: only the last layer stores the mean.
        @pl.when(l == n_layers - 1)
        def _():
            out_ref[...] = (new_acc * inv_layers).astype(out_ref.dtype)


def _pick_tile(n, desired, quantum):
    """Largest multiple of `quantum` dividing n and <= desired (n is a multiple of quantum)."""
    best = quantum
    t = quantum
    limit = min(desired, n)
    while t <= limit:
        if n % t == 0:
            best = t
        t += quantum
    return best


def _vmem_budget_bytes(n_p, d, tile_m, tile_k):
    x_pp  = 2 * n_p * d * 2           # bf16 ping-pong propagated embeddings
    acc   = n_p * d * 4               # f32 running layer sum
    y     = tile_m * d * 4            # f32 K accumulator
    adj   = 2 * tile_m * tile_k * 1   # int8 adjacency blocks (double buffered)
    ego   = 2 * tile_m * d * 4        # f32 ego blocks
    z0    = 2 * tile_k * d * 2        # bf16 pre-scaled ego blocks
    scale = 2 * tile_m * 128 * 4      # (tile_m, 1) blocks, lane-padded to 128
    outb  = 2 * tile_m * d * 4        # output blocks
    return x_pp + acc + y + adj + ego + z0 + scale + outb


def factor_norm_adj(norm_adj):
    """Factor a LightGCN-normalized adjacency D^-1/2 A D^-1/2 (A binary) into
    (binary A as int8, d^-1/2 vector).  Exact for the standard symmetric
    normalization; documents the precision choice of streaming A as int8."""
    bin_adj = (norm_adj > 0).astype(jnp.int8)
    deg = jnp.maximum(bin_adj.astype(jnp.float32).sum(axis=1), 1.0)
    d_inv_sqrt = 1.0 / jnp.sqrt(deg)
    return bin_adj, d_inv_sqrt


def sccf_encoder_forward(norm_adj, user_emb, item_emb, n_layers, *,
                         tile_m=512, tile_k=1024):
    """Pallas implementation of SCCF_Encoder.forward() -> (user_emb, item_emb)."""
    user_num = user_emb.shape[0]
    ego = jnp.concatenate([user_emb, item_emb], axis=0).astype(jnp.float32)  # [N, D]
    n, d = ego.shape

    if n_layers == 0:   # mean over the single ego layer
        return ego[:user_num], ego[user_num:]

    # Factor the dense normalized adjacency into (binary int8, degree scales).
    bin_adj, d_inv_sqrt = factor_norm_adj(norm_adj)

    # Pad N to a multiple of 128 so tile picking never degenerates and every
    # DMA tile stays (sublane, lane)-aligned.  Padded rows/cols are zero.
    pad = (-n) % 128
    n_p = n + pad
    if pad:
        ego = jnp.pad(ego, ((0, pad), (0, 0)))
        bin_adj = jnp.pad(bin_adj, ((0, pad), (0, pad)))
        d_inv_sqrt = jnp.pad(d_inv_sqrt, (0, pad))

    tile_m = _pick_tile(n_p, tile_m, 32)     # int8-sublane-aligned row tile
    tile_k = _pick_tile(n_p, tile_k, 128)    # lane-aligned contraction tile

    scale = d_inv_sqrt.reshape(n_p, 1).astype(jnp.float32)
    z0_bf16 = (scale * ego).astype(jnp.bfloat16)        # pre-scaled layer-0 input
    inv_layers = 1.0 / float(n_layers + 1)

    # Explicit VMEM budget -> compiler limit (default scoped limit is 16/32 MiB).
    budget = _vmem_budget_bytes(n_p, d, tile_m, tile_k)
    vmem_limit = max(int(budget * 1.3) + (4 << 20), 32 << 20)
    if vmem_limit > (100 << 20):
        # TODO(synk): for N beyond VMEM residency (esp. v7x's 64 MiB), move acc
        # and the bf16 ping-pong to HBM with per-layer read-modify-write.
        raise ValueError(
            f"VMEM budget {budget/2**20:.1f} MiB exceeds safe limit; reduce "
            "tiles or use the HBM-resident accumulator variant.")

    grid = (n_layers, n_p // tile_m, n_p // tile_k)
    kernel = functools.partial(_fused_sccf_kernel, inv_layers=inv_layers)

    out = pl.pallas_call(
        kernel,
        out_shape=jax.ShapeDtypeStruct((n_p, d), jnp.float32),
        grid_spec=pltpu.PrefetchScalarGridSpec(
            num_scalar_prefetch=0,
            grid=grid,
            in_specs=[
                # binary adjacency: (tile_m, tile_k) int8 blocks, re-streamed per layer
                pl.BlockSpec((tile_m, tile_k), lambda l, i, k: (i, k)),
                # d^-1/2 row scales for tile i (tiny)
                pl.BlockSpec((tile_m, 1), lambda l, i, k: (i, 0)),
                # f32 ego rows for acc init (only fetched during layer 0)
                pl.BlockSpec((tile_m, d),
                             lambda l, i, k: (jnp.where(l == 0, i, 0), 0)),
                # pre-scaled bf16 ego (only fetched while staging at l==0, i==0)
                pl.BlockSpec((tile_k, d),
                             lambda l, i, k: (jnp.where((l == 0) & (i == 0), k, 0), 0)),
            ],
            # Output index frozen at block 0 until the last layer -> exactly one
            # HBM writeback pass for the whole kernel.
            out_specs=pl.BlockSpec(
                (tile_m, d),
                lambda l, i, k: (jnp.where(l == n_layers - 1, i, 0), 0)),
            scratch_shapes=[
                pltpu.VMEM((2 * n_p, d), jnp.bfloat16),   # ping-pong pre-scaled x
                pltpu.VMEM((n_p, d), jnp.float32),        # running layer sum
                pltpu.VMEM((tile_m, d), jnp.float32),     # K accumulator
            ],
        ),
        compiler_params=pltpu.CompilerParams(
            # VMEM scratch carries state across every grid step -> sequential.
            # TODO(synk): v7x megacore split of the i axis via core_map +
            # VMEM_SHARED x-exchange (no effect on v5e/v6e: 1 TC/chip).
            dimension_semantics=("arbitrary", "arbitrary", "arbitrary"),
            vmem_limit_bytes=vmem_limit,
        ),
    )(bin_adj, scale, ego, z0_bf16)

    all_embeddings = out[:n]
    return all_embeddings[:user_num], all_embeddings[user_num:]


# ---------------------------------------------------------------------------
# Deterministic parameter / graph construction (synthetic, no checkpoints).
# ---------------------------------------------------------------------------
def xavier_uniform(key, shape):
    fan_in, fan_out = shape
    bound = jnp.sqrt(6.0 / (fan_in + fan_out))
    return jax.random.uniform(key, shape, jnp.float32, -bound, bound)


def build_norm_adj(key, user_num, item_num):
    """Dense symmetric-normalized bipartite adjacency D^-1/2 A D^-1/2."""
    # TODO(synk): torch.sparse.mm uses a sparse adjacency; densified here since
    # the Pallas kernel streams dense (binary int8) adjacency blocks.
    r = (jax.random.uniform(key, (user_num, item_num)) < 0.3).astype(jnp.float32)
    n = user_num + item_num
    adj = jnp.zeros((n, n), jnp.float32)
    adj = adj.at[:user_num, user_num:].set(r)
    adj = adj.at[user_num:, :user_num].set(r.T)
    deg = jnp.maximum(adj.sum(axis=1), 1.0)
    d_inv_sqrt = 1.0 / jnp.sqrt(deg)
    return adj * d_inv_sqrt[:, None] * d_inv_sqrt[None, :]


if __name__ == "__main__":
    key = jax.random.PRNGKey(0)
    k_adj, k_user, k_item = jax.random.split(key, 3)

    user_num, item_num = 96, 160        # N = 256 nodes (padded N stays 256)
    emb_size = 128
    n_layers = 2
    tile_m, tile_k = 128, 128           # -> grid (2, 2, 2): exercises every path

    user_emb = xavier_uniform(k_user, (user_num, emb_size))
    item_emb = xavier_uniform(k_item, (item_num, emb_size))
    norm_adj = build_norm_adj(k_adj, user_num, item_num)

    fwd = jax.jit(functools.partial(sccf_encoder_forward, n_layers=n_layers,
                                    tile_m=tile_m, tile_k=tile_k))
    user_out, item_out = fwd(norm_adj, user_emb, item_emb)
    jax.block_until_ready((user_out, item_out))

    # Reference 1: same arithmetic as the kernel (binary bf16 adjacency, exact
    # f32 degree scaling, bf16 propagated operands, f32 accumulation).
    ego = jnp.concatenate([user_emb, item_emb], axis=0)
    bin_f, s = factor_norm_adj(norm_adj)
    a_bf = bin_f.astype(jnp.bfloat16)
    s_col = s[:, None]
    z = (s_col * ego).astype(jnp.bfloat16)
    acc = ego
    for _ in range(n_layers):
        y = jnp.dot(a_bf, z, preferred_element_type=jnp.float32)
        ego_next = s_col * y
        acc = acc + ego_next
        z = (s_col * ego_next).astype(jnp.bfloat16)
    ref = acc / (n_layers + 1)
    assert jnp.allclose(user_out, ref[:user_num], atol=1e-3, rtol=1e-3)
    assert jnp.allclose(item_out, ref[user_num:], atol=1e-3, rtol=1e-3)

    # Reference 2: full float32 propagation (module semantics); loose tolerance
    # accounts for the intentional bf16 propagated-embedding precision choice.
    cur, acc = ego, ego
    for _ in range(n_layers):
        cur = jnp.dot(norm_adj, cur, preferred_element_type=jnp.float32)
        acc = acc + cur
    ref32 = acc / (n_layers + 1)
    assert jnp.allclose(user_out, ref32[:user_num], atol=1e-2, rtol=1e-2)
    assert jnp.allclose(item_out, ref32[user_num:], atol=1e-2, rtol=1e-2)

    print("KERNEL_OK")
</pallas_src>

<mosaic_0001>
module attributes {stable_mosaic.version = 11 : i64} {
  func.func @_fused_sccf_kernel(%arg0: i32, %arg1: i32, %arg2: i32, %arg3: memref<128x128xi8, #tpu.memory_space<vmem>>, %arg4: memref<128x1xf32, #tpu.memory_space<vmem>>, %arg5: memref<128x128xf32, #tpu.memory_space<vmem>>, %arg6: memref<128x128xbf16, #tpu.memory_space<vmem>>, %arg7: memref<128x128xf32, #tpu.memory_space<vmem>>, %arg8: memref<512x128xbf16, #tpu.memory_space<vmem>>, %arg9: memref<256x128xf32, #tpu.memory_space<vmem>>, %arg10: memref<128x128xf32, #tpu.memory_space<vmem>>) attributes {dimension_semantics = [#tpu.dimension_semantics<arbitrary>, #tpu.dimension_semantics<arbitrary>, #tpu.dimension_semantics<arbitrary>], iteration_bounds = array<i64: 2, 2, 2>, scalar_prefetch = 0 : i64, scratch_operands = 3 : i64, tpu.core_type = #tpu.core_type<tc>, window_params = [{transform_indices = @transform_0, window_bounds = array<i64: 128, 128>}, {transform_indices = @transform_1, window_bounds = array<i64: 128, 1>}, {transform_indices = @transform_2, window_bounds = array<i64: 128, 128>}, {transform_indices = @transform_3, window_bounds = array<i64: 128, 128>}, {transform_indices = @transform_4, window_bounds = array<i64: 128, 128>}]} {
    %c0_i32 = arith.constant 0 : i32
    %0 = arith.cmpi eq, %arg0, %c0_i32 : i32
    %c0_i32_0 = arith.constant 0 : i32
    %1 = arith.cmpi eq, %arg1, %c0_i32_0 : i32
    %2 = arith.andi %0, %1 : i1
    %3 = arith.extui %2 : i1 to i32
    %c0_i32_1 = arith.constant 0 : i32
    %4 = arith.cmpi ne, %3, %c0_i32_1 : i32
    scf.if %4 {
      %c128_i32_19 = arith.constant 128 : i32
      %38 = arith.muli %arg2, %c128_i32_19 : i32
      %39 = tpu.assume_multiple %38, 128 : i32
      %c0_20 = arith.constant 0 : index
      %c0_21 = arith.constant 0 : index
      %40 = vector.load %arg6[%c0_20, %c0_21] : memref<128x128xbf16, #tpu.memory_space<vmem>>, vector<128x128xbf16>
      %41 = arith.index_cast %39 : i32 to index
      %c0_22 = arith.constant 0 : index
      %42 = vector.load %arg8[%41, %c0_22] : memref<512x128xbf16, #tpu.memory_space<vmem>>, vector<128x128xbf16>
      tpu.vector_store %arg8[%41, %c0_22], %40 {strides = array<i32>} : memref<512x128xbf16, #tpu.memory_space<vmem>>, vector<128x128xbf16>,
    } else {
    }
    %c0_i32_2 = arith.constant 0 : i32
    %5 = arith.cmpi eq, %arg0, %c0_i32_2 : i32
    %c0_i32_3 = arith.constant 0 : i32
    %6 = arith.cmpi eq, %arg2, %c0_i32_3 : i32
    %7 = arith.andi %5, %6 : i1
    %8 = arith.extui %7 : i1 to i32
    %c0_i32_4 = arith.constant 0 : i32
    %9 = arith.cmpi ne, %8, %c0_i32_4 : i32
    scf.if %9 {
      %c128_i32_19 = arith.constant 128 : i32
      %38 = arith.muli %arg1, %c128_i32_19 : i32
      %39 = tpu.assume_multiple %38, 128 : i32
      %c0_20 = arith.constant 0 : index
      %c0_21 = arith.constant 0 : index
      %40 = vector.load %arg5[%c0_20, %c0_21] : memref<128x128xf32, #tpu.memory_space<vmem>>, vector<128x128xf32>
      %41 = arith.index_cast %39 : i32 to index
      %c0_22 = arith.constant 0 : index
      %42 = vector.load %arg9[%41, %c0_22] : memref<256x128xf32, #tpu.memory_space<vmem>>, vector<128x128xf32>
      tpu.vector_store %arg9[%41, %c0_22], %40 {strides = array<i32>} : memref<256x128xf32, #tpu.memory_space<vmem>>, vector<128x128xf32>,
    } else {
    }
    %c0_i32_5 = arith.constant 0 : i32
    %10 = arith.cmpi eq, %arg2, %c0_i32_5 : i32
    %11 = arith.extui %10 : i1 to i32
    %c0_i32_6 = arith.constant 0 : i32
    %12 = arith.cmpi ne, %11, %c0_i32_6 : i32
    scf.if %12 {
      %cst_19 = arith.constant 0.000000e+00 : f32
      %38 = vector.broadcast %cst_19 : f32 to vector<128x128xf32>
      %c0_20 = arith.constant 0 : index
      %c0_21 = arith.constant 0 : index
      %39 = vector.load %arg10[%c0_20, %c0_21] : memref<128x128xf32, #tpu.memory_space<vmem>>, vector<128x128xf32>
      tpu.vector_store %arg10[%c0_20, %c0_21], %38 {strides = array<i32>} : memref<128x128xf32, #tpu.memory_space<vmem>>, vector<128x128xf32>,
    } else {
    }
    %c0 = arith.constant 0 : index
    %c0_7 = arith.constant 0 : index
    %13 = vector.load %arg3[%c0, %c0_7] : memref<128x128xi8, #tpu.memory_space<vmem>>, vector<128x128xi8>
    %14 = arith.sitofp %13 : vector<128x128xi8> to vector<128x128xbf16>
    %c2_i32 = arith.constant 2 : i32
    %c0_i32_8 = arith.constant 0 : i32
    %15 = arith.cmpi eq, %c2_i32, %c0_i32_8 : i32
    %c1_i32 = arith.constant 1 : i32
    %16 = arith.select %15, %c1_i32, %c2_i32 : i32
    %17 = arith.remsi %arg0, %16 : i32
    %c0_i32_9 = arith.constant 0 : i32
    %18 = arith.cmpi ne, %17, %c0_i32_9 : i32
    %c0_i32_10 = arith.constant 0 : i32
    %19 = arith.cmpi slt, %17, %c0_i32_10 : i32
    %c0_i32_11 = arith.constant 0 : i32
    %20 = arith.cmpi slt, %16, %c0_i32_11 : i32
    %21 = arith.xori %19, %20 : i1
    %22 = arith.andi %21, %18 : i1
    %23 = arith.addi %17, %16 : i32
    %24 = arith.select %22, %23, %17 : i32
    %c256_i32 = arith.constant 256 : i32
    %25 = arith.muli %24, %c256_i32 : i32
    %c128_i32 = arith.constant 128 : i32
    %26 = arith.muli %arg2, %c128_i32 : i32
    %27 = arith.addi %25, %26 : i32
    %28 = tpu.assume_multiple %27, 128 : i32
    %29 = arith.index_cast %28 : i32 to index
    %c0_12 = arith.constant 0 : index
    %30 = vector.load %arg8[%29, %c0_12] : memref<512x128xbf16, #tpu.memory_space<vmem>>, vector<128x128xbf16>
    %c0_13 = arith.constant 0 : index
    %c0_14 = arith.constant 0 : index
    %31 = vector.load %arg10[%c0_13, %c0_14] : memref<128x128xf32, #tpu.memory_space<vmem>>, vector<128x128xf32>
    %cst = arith.constant dense<0.000000e+00> : vector<128x128xf32>
    %32 = tpu.matmul %14, %30, %cst {dimension_numbers = #tpu.dot_dimension_numbers<[1], [0], [0], [1], [0, 0, 1, 1], [], []>} : vector<128x128xbf16>, vector<128x128xbf16>, vector<128x128xf32> -> vector<128x128xf32>
    %33 = arith.addf %31, %32 : vector<128x128xf32>
    %c0_15 = arith.constant 0 : index
    %c0_16 = arith.constant 0 : index
    %34 = vector.load %arg10[%c0_15, %c0_16] : memref<128x128xf32, #tpu.memory_space<vmem>>, vector<128x128xf32>
    tpu.vector_store %arg10[%c0_15, %c0_16], %33 {strides = array<i32>} : memref<128x128xf32, #tpu.memory_space<vmem>>, vector<128x128xf32>,
    %c1_i32_17 = arith.constant 1 : i32
    %35 = arith.cmpi eq, %arg2, %c1_i32_17 : i32
    %36 = arith.extui %35 : i1 to i32
    %c0_i32_18 = arith.constant 0 : i32
    %37 = arith.cmpi ne, %36, %c0_i32_18 : i32
    scf.if %37 {
      %c0_19 = arith.constant 0 : index
      %c0_20 = arith.constant 0 : index
      %38 = vector.load %arg4[%c0_19, %c0_20] : memref<128x1xf32, #tpu.memory_space<vmem>>, vector<128x1xf32>
      %c0_21 = arith.constant 0 : index
      %c0_22 = arith.constant 0 : index
      %39 = vector.load %arg10[%c0_21, %c0_22] : memref<128x128xf32, #tpu.memory_space<vmem>>, vector<128x128xf32>
      %40 = vector.broadcast %38 : vector<128x1xf32> to vector<128x128xf32>
      %41 = arith.mulf %40, %39 : vector<128x128xf32>
      %c128_i32_23 = arith.constant 128 : i32
      %42 = arith.muli %arg1, %c128_i32_23 : i32
      %43 = tpu.assume_multiple %42, 128 : i32
      %44 = arith.index_cast %43 : i32 to index
      %c0_24 = arith.constant 0 : index
      %45 = vector.load %arg9[%44, %c0_24] : memref<256x128xf32, #tpu.memory_space<vmem>>, vector<128x128xf32>
      %46 = arith.addf %45, %41 : vector<128x128xf32>
      %47 = arith.index_cast %43 : i32 to index
      %c0_25 = arith.constant 0 : index
      %48 = vector.load %arg9[%47, %c0_25] : memref<256x128xf32, #tpu.memory_space<vmem>>, vector<128x128xf32>
      tpu.vector_store %arg9[%47, %c0_25], %46 {strides = array<i32>} : memref<256x128xf32, #tpu.memory_space<vmem>>, vector<128x128xf32>,
      %c1_i32_26 = arith.constant 1 : i32
      %49 = arith.addi %arg0, %c1_i32_26 : i32
      %c2_i32_27 = arith.constant 2 : i32
      %c0_i32_28 = arith.constant 0 : i32
      %50 = arith.cmpi eq, %c2_i32_27, %c0_i32_28 : i32
      %c1_i32_29 = arith.constant 1 : i32
      %51 = arith.select %50, %c1_i32_29, %c2_i32_27 : i32
      %52 = arith.remsi %49, %51 : i32
      %c0_i32_30 = arith.constant 0 : i32
      %53 = arith.cmpi ne, %52, %c0_i32_30 : i32
      %c0_i32_31 = arith.constant 0 : i32
      %54 = arith.cmpi slt, %52, %c0_i32_31 : i32
      %c0_i32_32 = arith.constant 0 : i32
      %55 = arith.cmpi slt, %51, %c0_i32_32 : i32
      %56 = arith.xori %54, %55 : i1
      %57 = arith.andi %56, %53 : i1
      %58 = arith.addi %52, %51 : i32
      %59 = arith.select %57, %58, %52 : i32
      %c256_i32_33 = arith.constant 256 : i32
      %60 = arith.muli %59, %c256_i32_33 : i32
      %c128_i32_34 = arith.constant 128 : i32
      %61 = arith.muli %arg1, %c128_i32_34 : i32
      %62 = arith.addi %60, %61 : i32
      %63 = tpu.assume_multiple %62, 128 : i32
      %64 = vector.broadcast %38 : vector<128x1xf32> to vector<128x128xf32>
      %65 = arith.mulf %64, %41 : vector<128x128xf32>
      %66 = arith.truncf %65 : vector<128x128xf32> to vector<128x128xbf16>
      %67 = arith.index_cast %63 : i32 to index
      %c0_35 = arith.constant 0 : index
      %68 = vector.load %arg8[%67, %c0_35] : memref<512x128xbf16, #tpu.memory_space<vmem>>, vector<128x128xbf16>
      tpu.vector_store %arg8[%67, %c0_35], %66 {strides = array<i32>} : memref<512x128xbf16, #tpu.memory_space<vmem>>, vector<128x128xbf16>,
      %c1_i32_36 = arith.constant 1 : i32
      %69 = arith.cmpi eq, %arg0, %c1_i32_36 : i32
      %70 = arith.extui %69 : i1 to i32
      %c0_i32_37 = arith.constant 0 : i32
      %71 = arith.cmpi ne, %70, %c0_i32_37 : i32
      scf.if %71 {
        %cst_38 = arith.constant 0.333333343 : f32
        %72 = vector.broadcast %cst_38 : f32 to vector<128x128xf32>
        %73 = arith.mulf %46, %72 : vector<128x128xf32>
        %c0_39 = arith.constant 0 : index
        %c0_40 = arith.constant 0 : index
        %74 = vector.load %arg7[%c0_39, %c0_40] : memref<128x128xf32, #tpu.memory_space<vmem>>, vector<128x128xf32>
        tpu.vector_store %arg7[%c0_39, %c0_40], %73 {strides = array<i32>} : memref<128x128xf32, #tpu.memory_space<vmem>>, vector<128x128xf32>,
      } else {
      }
    } else {
    }
    return
  }
  func.func @transform_0(%arg0: i32, %arg1: i32, %arg2: i32) -> (i32, i32) {
    %c0_i32 = arith.constant 0 : i32
    return %arg1, %arg2 : i32, i32
  }
  func.func @transform_1(%arg0: i32, %arg1: i32, %arg2: i32) -> (i32, i32) {
    %c0_i32 = arith.constant 0 : i32
    %c0_i32_0 = arith.constant 0 : i32
    return %arg1, %c0_i32 : i32, i32
  }
  func.func @transform_2(%arg0: i32, %arg1: i32, %arg2: i32) -> (i32, i32) {
    %c0_i32 = arith.constant 0 : i32
    %0 = arith.cmpi eq, %arg0, %c0_i32 : i32
    %c0_i32_0 = arith.constant 0 : i32
    %1 = arith.select %0, %arg1, %c0_i32_0 : i32
    %c0_i32_1 = arith.constant 0 : i32
    %c0_i32_2 = arith.constant 0 : i32
    return %1, %c0_i32_1 : i32, i32
  }
  func.func @transform_3(%arg0: i32, %arg1: i32, %arg2: i32) -> (i32, i32) {
    %c0_i32 = arith.constant 0 : i32
    %0 = arith.cmpi eq, %arg0, %c0_i32 : i32
    %c0_i32_0 = arith.constant 0 : i32
    %1 = arith.cmpi eq, %arg1, %c0_i32_0 : i32
    %2 = arith.andi %0, %1 : i1
    %c0_i32_1 = arith.constant 0 : i32
    %3 = arith.select %2, %arg2, %c0_i32_1 : i32
    %c0_i32_2 = arith.constant 0 : i32
    %c0_i32_3 = arith.constant 0 : i32
    return %3, %c0_i32_2 : i32, i32
  }
  func.func @transform_4(%arg0: i32, %arg1: i32, %arg2: i32) -> (i32, i32) {
    %c1_i32 = arith.constant 1 : i32
    %0 = arith.cmpi eq, %arg0, %c1_i32 : i32
    %c0_i32 = arith.constant 0 : i32
    %1 = arith.select %0, %arg1, %c0_i32 : i32
    %c0_i32_0 = arith.constant 0 : i32
    %c0_i32_1 = arith.constant 0 : i32
    return %1, %c0_i32_0 : i32, i32
  }
}

</mosaic_0001>

<llo_original>
// kernel: sccf_encoder_forward.1
$region0: #{sccf_encoder_forward.1}
  #allocation0 [shape = 'u32[]', space=smem, size = 0x4, offset = 0x4, fixed_abs, tag = 'smem constant byte address 0x4 - core index']
  #allocation1 [shape = 'u32[144,128]{1,0:T(1,128)}', space=vmem, size = 0x12000, scoped, tag = 'internal scratch']
  #allocation2 [shape = 'bf16[512,128]{1,0:T(16,128)(2,1)}', space=vmem, size = 0x20000, scoped, tag = 'scratch operand']
  #allocation3 [shape = 'f32[256,128]{1,0:T(8,128)}', space=vmem, size = 0x20000, scoped, tag = 'scratch operand']
  #allocation4 [shape = 'f32[128,128]{1,0:T(8,128)}', space=vmem, size = 0x10000, scoped, tag = 'scratch operand']
  %s0 = inlined_call_operand.vmem [shape: s8[256,256], index: 0, kind: input, shape index: {}]
  %s1 = inlined_call_operand.vmem [shape: f32[256,1], index: 1, kind: input, shape index: {}]
  %s2 = inlined_call_operand.vmem [shape: f32[256,128], index: 2, kind: input, shape index: {}]
  %s3 = inlined_call_operand.vmem [shape: bf16[256,128], index: 3, kind: input, shape index: {}]
  %s4 = inlined_call_operand.vmem [shape: f32[256,128], index: 4, kind: output, shape index: {}]
  %s5 = sld [smem:[#allocation0]]
  $region107: #{sccf_encoder_forward.1} parent=0
    _
  %s7 = ssub.s32 1, %s5
  %s8 = scalar_select 0, %s7, %s5
  $region1: #{sccf_encoder_forward.1} parent=0
    #allocation5 [shape = 'u8[32768]{0}', space=vmem, size = 0x8000, scoped, tag = 'input window, operand 0']
    loop: start=0, step=1, limit=10
    $region2: #{sccf_encoder_forward.1} parent=1 // loop_pre_header
      _
    $region3: #{sccf_encoder_forward.1} parent=1 // loop_header
      %s10 = sphi 0, %s14
      %p11 = scmp.ge.s32.totalorder %s10, 10
      %s17 = sphi 0, %s36
      %s18 = sphi 0, %s32
      %s19 = sphi 0, %s28
      %s20 = sphi 0, %s17
      %s21 = sphi 0, %s18
      %s22 = sphi 0, %s19
      %s23 = sphi 0, %s20
      %s24 = sphi 0, %s21
      %s25 = sphi 0, %s22
      %s41 = sphi 0, %s43
      %s44 = sphi 0, %s41
      %s45 = sphi 0, %s44
      %s61 = sphi 0, %s45
      %s67 = sphi 0, %s69
      %s70 = sphi 0, %s67
      %s71 = sphi 0, %s70
      %s87 = sphi 0, %s71
      %s97 = sphi 0, %s99
      %s100 = sphi 0, %s97
      %s101 = sphi 0, %s100
      %s117 = sphi 0, %s101
      %s133 = sphi 0, %s135
      %s136 = sphi 0, %s133
      %s137 = sphi 0, %s136
      %s153 = sphi 0, %s137
      %s163 = sphi 0, %s165
      %s166 = sphi 0, %s163
      %s167 = sphi 0, %s166
      %s183 = sphi 0, %s167
    $region4: #{sccf_encoder_forward.1} parent=1 // loop_header_branch
      %13 = sbr.rel (%p11) target = $region8
    $region5: #{sccf_encoder_forward.1} parent=1 // loop_body
      %s15 = ssub.s32 %s10, 1
      %s16 = ssub.s32 %s10, 2
      %s26 = sadd.s32 1, %s19
      %p27 = scmp.ge.s32.totalorder %s26, 2
      %s28 = scalar_select %p27, 0, %s26
      %s29 = sadd.s32 1, %s18
      %s30 = scalar_select %p27, %s29, %s18
      %p31 = scmp.ge.s32.totalorder %s30, 2
      %s32 = scalar_select %p31, 0, %s30
      %s33 = sadd.s32 1, %s17
      %s34 = scalar_select %p31, %s33, %s17
      %p35 = scmp.ge.s32.totalorder %s34, 2
      %s36 = scalar_select %p35, 0, %s34
      %s37 = ssub.s32 %s18, %s32
      %s38 = ssub.s32 %s19, %s28
      %s39 = sor.u32 %s37, %s38
      %p40 = scmp.eq.s32.totalorder %s39, 0
      %s42 = sadd.s32 %s41, 1
      %s43 = scalar_select %p40, %s41, %s42
      %p46 = pneg %p40
      %p47 = scmp.eq.s32.totalorder %s10, 7
      %p48 = por %p46, %p47
      %p49 = scmp.ne.s32.totalorder %s41, %s44
      %p50 = scmp.eq.s32.totalorder %s10, 0
      %p51 = por %p49, %p50
      %p52 = scmp.ne.s32.totalorder %s41, %s44
      %p53 = scmp.eq.s32.totalorder %s15, 7
      %p54 = por %p52, %p53
      %p55 = scmp.ne.s32.totalorder %s44, %s45
      %p56 = scmp.eq.s32.totalorder %s15, 0
      %p57 = por %p55, %p56
      %p58 = scmp.ne.s32.totalorder %s44, %s45
      %p59 = scmp.eq.s32.totalorder %s16, 7
      %p60 = por %p58, %p59
      %p62 = scmp.ne.s32.totalorder %s45, %s61
      %p63 = scmp.eq.s32.totalorder %s16, 0
      %p64 = por %p62, %p63
      %s65 = ssub.s32 %s18, %s32
      %p66 = scmp.eq.s32.totalorder %s65, 0
      %s68 = sadd.s32 %s67, 1
      %s69 = scalar_select %p66, %s67, %s68
      %p72 = pneg %p66
      %p73 = scmp.eq.s32.totalorder %s10, 7
      %p74 = por %p72, %p73
      %p75 = scmp.ne.s32.totalorder %s67, %s70
      %p76 = scmp.eq.s32.totalorder %s10, 0
      %p77 = por %p75, %p76
      %p78 = scmp.ne.s32.totalorder %s67, %s70
      %p79 = scmp.eq.s32.totalorder %s15, 7
      %p80 = por %p78, %p79
      %p81 = scmp.ne.s32.totalorder %s70, %s71
      %p82 = scmp.eq.s32.totalorder %s15, 0
      %p83 = por %p81, %p82
      %p84 = scmp.ne.s32.totalorder %s70, %s71
      %p85 = scmp.eq.s32.totalorder %s16, 7
      %p86 = por %p84, %p85
      %p88 = scmp.ne.s32.totalorder %s71, %s87
      %p89 = scmp.eq.s32.totalorder %s16, 0
      %p90 = por %p88, %p89
      %p91 = scmp.eq.s32.totalorder %s17, 0
      %s92 = scalar_select %p91, %s18, 0
      %p93 = scmp.eq.s32.totalorder %s36, 0
      %s94 = scalar_select %p93, %s32, 0
      %s95 = ssub.s32 %s92, %s94
      %p96 = scmp.eq.s32.totalorder %s95, 0
      %s98 = sadd.s32 %s97, 1
      %s99 = scalar_select %p96, %s97, %s98
      %p102 = pneg %p96
      %p103 = scmp.eq.s32.totalorder %s10, 7
      %p104 = por %p102, %p103
      %p105 = scmp.ne.s32.totalorder %s97, %s100
      %p106 = scmp.eq.s32.totalorder %s10, 0
      %p107 = por %p105, %p106
      %p108 = scmp.ne.s32.totalorder %s97, %s100
      %p109 = scmp.eq.s32.totalorder %s15, 7
      %p110 = por %p108, %p109
      %p111 = scmp.ne.s32.totalorder %s100, %s101
      %p112 = scmp.eq.s32.totalorder %s15, 0
      %p113 = por %p111, %p112
      %p114 = scmp.ne.s32.totalorder %s100, %s101
      %p115 = scmp.eq.s32.totalorder %s16, 7
      %p116 = por %p114, %p115
      %p118 = scmp.ne.s32.totalorder %s101, %s117
      %p119 = scmp.eq.s32.totalorder %s16, 0
      %p120 = por %p118, %p119
      %p121 = scmp.eq.s32.totalorder %s17, 0
      %p122 = scmp.eq.s32.totalorder %s18, 0
      %p123 = pnand %p121, %p122
      %p124 = pneg %p123
      %s125 = scalar_select %p124, %s19, 0
      %p126 = scmp.eq.s32.totalorder %s36, 0
      %p127 = scmp.eq.s32.totalorder %s32, 0
      %p128 = pnand %p126, %p127
      %p129 = pneg %p128
      %s130 = scalar_select %p129, %s28, 0
      %s131 = ssub.s32 %s125, %s130
      %p132 = scmp.eq.s32.totalorder %s131, 0
      %s134 = sadd.s32 %s133, 1
      %s135 = scalar_select %p132, %s133, %s134
      %p138 = pneg %p132
      %p139 = scmp.eq.s32.totalorder %s10, 7
      %p140 = por %p138, %p139
      %p141 = scmp.ne.s32.totalorder %s133, %s136
      %p142 = scmp.eq.s32.totalorder %s10, 0
      %p143 = por %p141, %p142
      %p144 = scmp.ne.s32.totalorder %s133, %s136
      %p145 = scmp.eq.s32.totalorder %s15, 7
      %p146 = por %p144, %p145
      %p147 = scmp.ne.s32.totalorder %s136, %s137
      %p148 = scmp.eq.s32.totalorder %s15, 0
      %p149 = por %p147, %p148
      %p150 = scmp.ne.s32.totalorder %s136, %s137
      %p151 = scmp.eq.s32.totalorder %s16, 7
      %p152 = por %p150, %p151
      %p154 = scmp.ne.s32.totalorder %s137, %s153
      %p155 = scmp.eq.s32.totalorder %s16, 0
      %p156 = por %p154, %p155
      %p157 = scmp.eq.s32.totalorder %s17, 1
      %s158 = scalar_select %p157, %s18, 0
      %p159 = scmp.eq.s32.totalorder %s36, 1
      %s160 = scalar_select %p159, %s32, 0
      %s161 = ssub.s32 %s158, %s160
      %p162 = scmp.eq.s32.totalorder %s161, 0
      %s164 = sadd.s32 %s163, 1
      %s165 = scalar_select %p162, %s163, %s164
      %p168 = pneg %p162
      %p169 = scmp.eq.s32.totalorder %s10, 7
      %p170 = por %p168, %p169
      %p171 = scmp.ne.s32.totalorder %s163, %s166
      %p172 = scmp.eq.s32.totalorder %s10, 0
      %p173 = por %p171, %p172
      %p174 = scmp.ne.s32.totalorder %s163, %s166
      %p175 = scmp.eq.s32.totalorder %s15, 7
      %p176 = por %p174, %p175
      %p177 = scmp.ne.s32.totalorder %s166, %s167
      %p178 = scmp.eq.s32.totalorder %s15, 0
      %p179 = por %p177, %p178
      %p180 = scmp.ne.s32.totalorder %s166, %s167
      %p181 = scmp.eq.s32.totalorder %s16, 7
      %p182 = por %p180, %p181
      %p184 = scmp.ne.s32.totalorder %s167, %s183
      %p185 = scmp.eq.s32.totalorder %s16, 0
      %p186 = por %p184, %p185
      %p187 = scmp.le.s32.totalorder 1, %s10
      %p188 = scmp.lt.s32.totalorder %s10, 9
      %p189 = pnand %p187, %p188
      %p190 = pneg %p189
      // Predicated region
      $region9: #{sccf_encoder_forward.1} parent=5 // pred_check
        _
      $region10: #{sccf_encoder_forward.1} parent=5 // pred_check_branch
        %192 = sbr.rel (%p189) target = $region12
      $region11: #{sccf_encoder_forward.1} parent=5 // pred_region
        %s193 = ssub.s32 %s10, 1
      $region12: #{sccf_encoder_forward.1} parent=5 // pred_fallthru
        _
      %p194 = scmp.lt.s32.totalorder %s10, 8
      // Predicated region
      $region13: #{sccf_encoder_forward.1} parent=5 // pred_check
        %p195 = pneg %p194
      $region14: #{sccf_encoder_forward.1} parent=5 // pred_check_branch
        %197 = sbr.rel (%p195) target = $region16
      $region15: #{sccf_encoder_forward.1} parent=5 // pred_region
        // Predicated region
        $region17: #{sccf_encoder_forward.1} parent=15 // pred_check
          %p198 = pneg %p51
        $region18: #{sccf_encoder_forward.1} parent=15 // pred_check_branch
          %200 = sbr.rel (%p198) target = $region20
        $region19: #{sccf_encoder_forward.1} parent=15 // pred_region
          %s201 = sand.u32 %s41, 1
          %s202 = sand.u32 %s41, 1
          %s203 = smul.addr %s202, 32
          %s204 = scalar_lea.vmem [#allocation5], %s203
          %s205 = smul.u32 4, %s18
          %s206 = smul.addr %s205, 2
          %s207 = sadd.s32 %s19, %s206
          %s208 = smul.addr %s207, 8
          %s209 = scalar_lea.vmem %s0, %s208
          // Predicated region
          $region21: #{sccf_encoder_forward.1} parent=19 // pred_check
            _
          $region22: #{sccf_encoder_forward.1} parent=19 // pred_check_branch
            %211 = sbr.rel (0) target = $region24
          $region23: #{sccf_encoder_forward.1} parent=19 // pred_region
            // Predicated region
            $region25: #{sccf_encoder_forward.1} parent=23 // pred_check
              _
            $region26: #{sccf_encoder_forward.1} parent=23 // pred_check_branch
              %213 = sbr.rel (0) target = $region28
            $region27: #{sccf_encoder_forward.1} parent=23 // pred_region
              // Predicated region
              $region40: #{sccf_encoder_forward.1} parent=27 // pred_check
                _
              $region41: #{sccf_encoder_forward.1} parent=27 // pred_check_branch
                %234 = sbr.rel (0) target = $region43
              $region42: #{sccf_encoder_forward.1} parent=27 // pred_region
                loop: start=0, step=1, limit=1
                $region44: #{sccf_encoder_forward.1} parent=42 // loop_pre_header
                  _
                $region45: #{sccf_encoder_forward.1} parent=42 // loop_header
                  %s236 = sphi 0, %s240
                  %p237 = scmp.ge.s32.totalorder %s236, 1
                  %s241 = sphi %s209, %s209
                  %s242 = sphi %s204, %s204
                $region46: #{sccf_encoder_forward.1} parent=42 // loop_header_branch
                  %239 = sbr.rel (%p237) target = $region50
                $region47: #{sccf_encoder_forward.1} parent=42 // loop_body
                  %v243 = vld [vmem:[%s241] sm:$0xff]
                  %244 = vst [vmem:[%s242] sm:$0xff] %v243
                  %v245 = vld [vmem:[%s241 + $0x10] sm:$0xff]
                  %246 = vst [vmem:[%s242 + $0x8] sm:$0xff] %v245
                  %v247 = vld [vmem:[%s241 + $0x20] sm:$0xff]
                  %248 = vst [vmem:[%s242 + $0x10] sm:$0xff] %v247
                  %v249 = vld [vmem:[%s241 + $0x30] sm:$0xff]
                  %250 = vst [vmem:[%s242 + $0x18] sm:$0xff] %v249
                $region48: #{sccf_encoder_forward.1} parent=42 // loop_footer
                  %s240 = sadd.s32 1, %s236
                $region49: #{sccf_encoder_forward.1} parent=42 // loop_footer_branch
                  %235 = sbr.rel target = $region45
                $region50: #{sccf_encoder_forward.1} parent=42 // loop_exit
                  _
              $region43: #{sccf_encoder_forward.1} parent=27 // pred_fallthru
                _
              // Predicated region
              $region51: #{sccf_encoder_forward.1} parent=27 // pred_check
                _
              $region52: #{sccf_encoder_forward.1} parent=27 // pred_check_branch
                %252 = sbr.rel target = $region54
              $region53: #{sccf_encoder_forward.1} parent=27 // pred_region
                _
              $region54: #{sccf_encoder_forward.1} parent=27 // pred_fallthru
                _
            $region28: #{sccf_encoder_forward.1} parent=23 // pred_fallthru
              _
            // Predicated region
            $region29: #{sccf_encoder_forward.1} parent=23 // pred_check
              _
            $region30: #{sccf_encoder_forward.1} parent=23 // pred_check_branch
              %215 = sbr.rel target = $region32
            $region31: #{sccf_encoder_forward.1} parent=23 // pred_region
              loop: start=0, step=1, limit=1
              $region33: #{sccf_encoder_forward.1} parent=31 // loop_pre_header
                _
              $region34: #{sccf_encoder_forward.1} parent=31 // loop_header
                %s218 = sphi 0, %s222
                %p219 = scmp.ge.s32.totalorder %s218, 1
                %s223 = sphi %s209, %s209
                %s224 = sphi %s204, %s204
              $region35: #{sccf_encoder_forward.1} parent=31 // loop_header_branch
                %221 = sbr.rel (%p219) target = $region39
              $region36: #{sccf_encoder_forward.1} parent=31 // loop_body
                %v225 = vld [vmem:[%s223] sm:$0xff]
                %226 = vst [vmem:[%s224] sm:$0xff] %v225
                %v227 = vld [vmem:[%s223 + $0x10] sm:$0xff]
                %228 = vst [vmem:[%s224 + $0x8] sm:$0xff] %v227
                %v229 = vld [vmem:[%s223 + $0x20] sm:$0xff]
                %230 = vst [vmem:[%s224 + $0x10] sm:$0xff] %v229
                %v231 = vld [vmem:[%s223 + $0x30] sm:$0xff]
                %232 = vst [vmem:[%s224 + $0x18] sm:$0xff] %v231
              $region37: #{sccf_encoder_forward.1} parent=31 // loop_footer
                %s222 = sadd.s32 1, %s218
              $region38: #{sccf_encoder_forward.1} parent=31 // loop_footer_branch
                %217 = sbr.rel target = $region34
              $region39: #{sccf_encoder_forward.1} parent=31 // loop_exit
                _
            $region32: #{sccf_encoder_forward.1} parent=23 // pred_fallthru
              _
          $region24: #{sccf_encoder_forward.1} parent=19 // pred_fallthru
            _
          %253 = vnop
        $region20: #{sccf_encoder_forward.1} parent=15 // pred_fallthru
          _
        // Predicated region
        $region55: #{sccf_encoder_forward.1} parent=15 // pred_check
          %p254 = pneg %p77
        $region56: #{sccf_encoder_forward.1} parent=15 // pred_check_branch
          %256 = sbr.rel (%p254) target = $region58
        $region57: #{sccf_encoder_forward.1} parent=15 // pred_region
          %s257 = smul.u32 16, %s18
          %p258 = scmp.lt.s32.totalorder %s257, 31
          %s259 = scalar_select %p258, %s257, 31
          %s260 = smul.addr %s259, 8
          %s261 = scalar_lea.vmem %s1, %s260
          %s262 = smul.u32 16, %s18
        $region58: #{sccf_encoder_forward.1} parent=15 // pred_fallthru
          _
        // Predicated region
        $region59: #{sccf_encoder_forward.1} parent=15 // pred_check
          %p263 = pneg %p107
        $region60: #{sccf_encoder_forward.1} parent=15 // pred_check_branch
          %265 = sbr.rel (%p263) target = $region62
        $region61: #{sccf_encoder_forward.1} parent=15 // pred_region
          %p266 = scmp.eq.s32.totalorder %s17, 0
          %s267 = scalar_select %p266, %s18, 0
          %s268 = smul.u32 16, %s267
          %p269 = scmp.lt.s32.totalorder %s268, 31
          %s270 = scalar_select %p269, %s268, 31
          %s271 = smul.addr %s270, 8
          %s272 = scalar_lea.vmem %s2, %s271
          %p273 = scmp.eq.s32.totalorder %s17, 0
          %s274 = scalar_select %p273, %s18, 0
          %s275 = smul.u32 16, %s274
        $region62: #{sccf_encoder_forward.1} parent=15 // pred_fallthru
          _
        // Predicated region
        $region63: #{sccf_encoder_forward.1} parent=15 // pred_check
          %p276 = pneg %p143
        $region64: #{sccf_encoder_forward.1} parent=15 // pred_check_branch
          %278 = sbr.rel (%p276) target = $region66
        $region65: #{sccf_encoder_forward.1} parent=15 // pred_region
          %p279 = scmp.eq.s32.totalorder %s17, 0
          %p280 = scmp.eq.s32.totalorder %s18, 0
          %p281 = pnand %p279, %p280
          %p282 = pneg %p281
          %s283 = scalar_select %p282, %s19, 0
          %s284 = smul.u32 16, %s283
          %p285 = scmp.lt.s32.totalorder %s284, 31
          %s286 = scalar_select %p285, %s284, 31
          %s287 = smul.addr %s286, 4
          %s288 = scalar_lea.vmem %s3, %s287
          %p289 = scmp.eq.s32.totalorder %s17, 0
          %p290 = scmp.eq.s32.totalorder %s18, 0
          %p291 = pnand %p289, %p290
          %p292 = pneg %p291
          %s293 = scalar_select %p292, %s19, 0
          %s294 = smul.u32 16, %s293
        $region66: #{sccf_encoder_forward.1} parent=15 // pred_fallthru
          _
      $region16: #{sccf_encoder_forward.1} parent=5 // pred_fallthru
        _
      %p295 = scmp.le.s32.totalorder 1, %s10
      %p296 = scmp.lt.s32.totalorder %s10, 9
      %p297 = pnand %p295, %p296
      %p298 = pneg %p297
      // Predicated region
      $region67: #{sccf_encoder_forward.1} parent=5 // pred_check
        _
      $region68: #{sccf_encoder_forward.1} parent=5 // pred_check_branch
        %300 = sbr.rel (%p297) target = $region70
      $region69: #{sccf_encoder_forward.1} parent=5 // pred_region
        %s301 = ssub.s32 %s10, 1
        %s302 = sand.u32 %s44, 1
        %s303 = sand.u32 %s44, 1
        %s304 = smul.addr %s303, 32
        %s305 = scalar_lea.vmem [#allocation5], %s304
        // Predicated region
        $region71: #{sccf_encoder_forward.1} parent=69 // pred_check
          %p306 = pneg %p57
        $region72: #{sccf_encoder_forward.1} parent=69 // pred_check_branch
          %308 = sbr.rel (%p306) target = $region74
        $region73: #{sccf_encoder_forward.1} parent=69 // pred_region
          _
        $region74: #{sccf_encoder_forward.1} parent=69 // pred_fallthru
          _
        %s309 = sand.u32 %s44, 1
        %s310 = sand.u32 %s44, 1
        %s311 = smul.addr %s310, 32
        %s312 = scalar_lea.vmem [#allocation5], %s311
        %p313 = pneg %p57
        %p314 = pneg %p54
        %s315 = smul.u32 16, %s21
        %p316 = scmp.lt.s32.totalorder %s315, 31
        %s317 = scalar_select %p316, %s315, 31
        %s318 = smul.addr %s317, 8
        %s319 = scalar_lea.vmem %s1, %s318
        %p320 = pneg %p83
        %p321 = pneg %p80
        %p322 = scmp.eq.s32.totalorder %s20, 0
        %s323 = scalar_select %p322, %s21, 0
        %s324 = smul.u32 16, %s323
        %p325 = scmp.lt.s32.totalorder %s324, 31
        %s326 = scalar_select %p325, %s324, 31
        %s327 = smul.addr %s326, 8
        %s328 = scalar_lea.vmem %s2, %s327
        %p329 = pneg %p113
        %p330 = pneg %p110
        %p331 = scmp.eq.s32.totalorder %s20, 0
        %p332 = scmp.eq.s32.totalorder %s21, 0
        %p333 = pnand %p331, %p332
        %p334 = pneg %p333
        %s335 = scalar_select %p334, %s22, 0
        %s336 = smul.u32 16, %s335
        %p337 = scmp.lt.s32.totalorder %s336, 31
        %s338 = scalar_select %p337, %s336, 31
        %s339 = smul.addr %s338, 4
        %s340 = scalar_lea.vmem %s3, %s339
        %p341 = pneg %p149
        %p342 = pneg %p146
        %p343 = pneg %p179
        %p344 = pneg %p176
        %p345 = scmp.eq.s32.totalorder %s20, 1
        %s346 = scalar_select %p345, %s21, 0
        %s347 = smul.u32 16, %s346
        %p348 = scmp.lt.s32.totalorder %s347, 31
        %s349 = scalar_select %p348, %s347, 31
        %s350 = smul.addr %s349, 8
        %s351 = scalar_lea.vmem %s4, %s350
        %s352 = smul.u32 4, %s21
        %s353 = smul.u32 16, %s21
        %p354 = scmp.lt.s32.totalorder %s353, 31
        %s355 = scalar_select %p354, %s353, 31
        %s356 = smul.addr %s355, 8
        %s357 = scalar_lea.vmem %s1, %s356
        %s358 = smul.u32 16, %s21
        %p359 = scmp.eq.s32.totalorder %s20, 0
        %s360 = scalar_select %p359, %s21, 0
        %s361 = smul.u32 16, %s360
        %p362 = scmp.lt.s32.totalorder %s361, 31
        %s363 = scalar_select %p362, %s361, 31
        %s364 = smul.addr %s363, 8
        %s365 = scalar_lea.vmem %s2, %s364
        %p366 = scmp.eq.s32.totalorder %s20, 0
        %s367 = scalar_select %p366, %s21, 0
        %s368 = smul.u32 16, %s367
        %p369 = scmp.eq.s32.totalorder %s20, 0
        %p370 = scmp.eq.s32.totalorder %s21, 0
        %p371 = pnand %p369, %p370
        %p372 = pneg %p371
        %s373 = scalar_select %p372, %s22, 0
        %s374 = smul.u32 16, %s373
        %p375 = scmp.lt.s32.totalorder %s374, 31
        %s376 = scalar_select %p375, %s374, 31
        %s377 = smul.addr %s376, 4
        %s378 = scalar_lea.vmem %s3, %s377
        %p379 = scmp.eq.s32.totalorder %s20, 0
        %p380 = scmp.eq.s32.totalorder %s21, 0
        %p381 = pnand %p379, %p380
        %p382 = pneg %p381
        %s383 = scalar_select %p382, %s22, 0
        %s384 = smul.u32 16, %s383
        %p385 = scmp.eq.s32.totalorder %s20, 1
        %s386 = scalar_select %p385, %s21, 0
        %s387 = smul.u32 16, %s386
        %p388 = scmp.lt.s32.totalorder %s387, 31
        %s389 = scalar_select %p388, %s387, 31
        %s390 = smul.addr %s389, 8
        %s391 = scalar_lea.vmem %s4, %s390
        %p392 = scmp.eq.s32.totalorder %s20, 1
        %s393 = scalar_select %p392, %s21, 0
        %s394 = smul.u32 16, %s393
        %p396 = scmp.eq.s32.totalorder %s20, 0
        %p397 = scmp.eq.s32.totalorder %s21, 0
        %p398 = pnand %p396, %p397
        %p399 = pneg %p398
        // Predicated region
        $region75: #{sccf_encoder_forward.1} parent=69 // pred_check
          _
        $region76: #{sccf_encoder_forward.1} parent=69 // pred_check_branch
          %401 = sbr.rel (%p398) target = $region78
        $region77: #{sccf_encoder_forward.1} parent=69 // pred_region
          %s402 = smul.u32 %s22, 128
          %v403 = vld [vmem:[%s378] sm:$0xf]
          %v404 = vld [vmem:[%s378 + $0x4] sm:$0xf]
          %v405 = vld [vmem:[%s378 + $0x8] sm:$0xf]
          %v406 = vld [vmem:[%s378 + $0xc] sm:$0xf]
          %v407 = vld [vmem:[%s378 + $0x10] sm:$0xf]
          %v408 = vld [vmem:[%s378 + $0x14] sm:$0xf]
          %v409 = vld [vmem:[%s378 + $0x18] sm:$0xf]
          %v410 = vld [vmem:[%s378 + $0x1c] sm:$0xf]
          %v411 = vld [vmem:[%s378 + $0x20] sm:$0xf]
          %v412 = vld [vmem:[%s378 + $0x24] sm:$0xf]
          %v413 = vld [vmem:[%s378 + $0x28] sm:$0xf]
          %v414 = vld [vmem:[%s378 + $0x2c] sm:$0xf]
          %v415 = vld [vmem:[%s378 + $0x30] sm:$0xf]
          %v416 = vld [vmem:[%s378 + $0x34] sm:$0xf]
          %v417 = vld [vmem:[%s378 + $0x38] sm:$0xf]
          %v418 = vld [vmem:[%s378 + $0x3c] sm:$0xf]
          %v435 = vunpack.c.l.b16 %v403
          %v436 = vunpack.c.l.b16 %v404
          %v437 = vunpack.c.l.b16 %v405
          %v438 = vunpack.c.l.b16 %v406
          %v439 = vunpack.c.l.b16 %v407
          %v440 = vunpack.c.l.b16 %v408
          %v441 = vunpack.c.l.b16 %v409
          %v442 = vunpack.c.l.b16 %v410
          %v443 = vunpack.c.l.b16 %v411
          %v444 = vunpack.c.l.b16 %v412
          %v445 = vunpack.c.l.b16 %v413
          %v446 = vunpack.c.l.b16 %v414
          %v447 = vunpack.c.l.b16 %v415
          %v448 = vunpack.c.l.b16 %v416
          %v449 = vunpack.c.l.b16 %v417
          %v450 = vunpack.c.l.b16 %v418
          %v451 = vpack.c.b16 %v436, %v435
          %v452 = vpack.c.b16 %v438, %v437
          %v453 = vpack.c.b16 %v440, %v439
          %v454 = vpack.c.b16 %v442, %v441
          %v455 = vpack.c.b16 %v444, %v443
          %v456 = vpack.c.b16 %v446, %v445
          %v457 = vpack.c.b16 %v448, %v447
          %v458 = vpack.c.b16 %v450, %v449
          %s467 = sshra.s32 %s402, 4
          %s468 = sand.u32 %s402, 15
          %s469 = smul.addr %s467, 8
          %s470 = scalar_lea.vmem [#allocation2], %s469
          %471 = vst [vmem:[%s470] sm:$0xff] %v451
          %472 = vst [vmem:[%s470 + $0x8] sm:$0xff] %v452
          %473 = vst [vmem:[%s470 + $0x10] sm:$0xff] %v453
          %474 = vst [vmem:[%s470 + $0x18] sm:$0xff] %v454
          %475 = vst [vmem:[%s470 + $0x20] sm:$0xff] %v455
          %476 = vst [vmem:[%s470 + $0x28] sm:$0xff] %v456
          %477 = vst [vmem:[%s470 + $0x30] sm:$0xff] %v457
          %478 = vst [vmem:[%s470 + $0x38] sm:$0xff] %v458
        $region78: #{sccf_encoder_forward.1} parent=69 // pred_fallthru
          _
        %p479 = scmp.eq.s32.totalorder %s22, 0
        %p480 = pnand %p396, %p479
        %p481 = pneg %p480
        // Predicated region
        $region79: #{sccf_encoder_forward.1} parent=69 // pred_check
          _
        $region80: #{sccf_encoder_forward.1} parent=69 // pred_check_branch
          %483 = sbr.rel (%p480) target = $region82
        $region81: #{sccf_encoder_forward.1} parent=69 // pred_region
          %s484 = smul.u32 %s21, 128
          %v485 = vld [vmem:[%s365] sm:$0xff]
          %v486 = vld [vmem:[%s365 + $0x8] sm:$0xff]
          %v487 = vld [vmem:[%s365 + $0x10] sm:$0xff]
          %v488 = vld [vmem:[%s365 + $0x18] sm:$0xff]
          %v489 = vld [vmem:[%s365 + $0x20] sm:$0xff]
          %v490 = vld [vmem:[%s365 + $0x28] sm:$0xff]
          %v491 = vld [vmem:[%s365 + $0x30] sm:$0xff]
          %v492 = vld [vmem:[%s365 + $0x38] sm:$0xff]
          %v493 = vld [vmem:[%s365 + $0x40] sm:$0xff]
          %v494 = vld [vmem:[%s365 + $0x48] sm:$0xff]
          %v495 = vld [vmem:[%s365 + $0x50] sm:$0xff]
          %v496 = vld [vmem:[%s365 + $0x58] sm:$0xff]
          %v497 = vld [vmem:[%s365 + $0x60] sm:$0xff]
          %v498 = vld [vmem:[%s365 + $0x68] sm:$0xff]
          %v499 = vld [vmem:[%s365 + $0x70] sm:$0xff]
          %v500 = vld [vmem:[%s365 + $0x78] sm:$0xff]
          %s501 = scalar_lea.vmem [#allocation3], %s484
          %502 = vst [vmem:[%s501] sm:$0xff] %v485
          %503 = vst [vmem:[%s501 + $0x8] sm:$0xff] %v486
          %504 = vst [vmem:[%s501 + $0x10] sm:$0xff] %v487
          %505 = vst [vmem:[%s501 + $0x18] sm:$0xff] %v488
          %506 = vst [vmem:[%s501 + $0x20] sm:$0xff] %v489
          %507 = vst [vmem:[%s501 + $0x28] sm:$0xff] %v490
          %508 = vst [vmem:[%s501 + $0x30] sm:$0xff] %v491
          %509 = vst [vmem:[%s501 + $0x38] sm:$0xff] %v492
          %510 = vst [vmem:[%s501 + $0x40] sm:$0xff] %v493
          %511 = vst [vmem:[%s501 + $0x48] sm:$0xff] %v494
          %512 = vst [vmem:[%s501 + $0x50] sm:$0xff] %v495
          %513 = vst [vmem:[%s501 + $0x58] sm:$0xff] %v496
          %514 = vst [vmem:[%s501 + $0x60] sm:$0xff] %v497
          %515 = vst [vmem:[%s501 + $0x68] sm:$0xff] %v498
          %516 = vst [vmem:[%s501 + $0x70] sm:$0xff] %v499
          %517 = vst [vmem:[%s501 + $0x78] sm:$0xff] %v500
        $region82: #{sccf_encoder_forward.1} parent=69 // pred_fallthru
          _
        // Predicated region
        $region83: #{sccf_encoder_forward.1} parent=69 // pred_check
          %p518 = pneg %p479
        $region84: #{sccf_encoder_forward.1} parent=69 // pred_check_branch
          %520 = sbr.rel (%p518) target = $region86
        $region85: #{sccf_encoder_forward.1} parent=69 // pred_region
          %521 = vst [vmem:[#allocation4] sm:$0xff] 0.0
          %522 = vst [vmem:[#allocation4 + $0x8] sm:$0xff] 0.0
          %523 = vst [vmem:[#allocation4 + $0x10] sm:$0xff] 0.0
          %524 = vst [vmem:[#allocation4 + $0x18] sm:$0xff] 0.0
          %525 = vst [vmem:[#allocation4 + $0x20] sm:$0xff] 0.0
          %526 = vst [vmem:[#allocation4 + $0x28] sm:$0xff] 0.0
          %527 = vst [vmem:[#allocation4 + $0x30] sm:$0xff] 0.0
          %528 = vst [vmem:[#allocation4 + $0x38] sm:$0xff] 0.0
          %529 = vst [vmem:[#allocation4 + $0x40] sm:$0xff] 0.0
          %530 = vst [vmem:[#allocation4 + $0x48] sm:$0xff] 0.0
          %531 = vst [vmem:[#allocation4 + $0x50] sm:$0xff] 0.0
          %532 = vst [vmem:[#allocation4 + $0x58] sm:$0xff] 0.0
          %533 = vst [vmem:[#allocation4 + $0x60] sm:$0xff] 0.0
          %534 = vst [vmem:[#allocation4 + $0x68] sm:$0xff] 0.0
          %535 = vst [vmem:[#allocation4 + $0x70] sm:$0xff] 0.0
          %536 = vst [vmem:[#allocation4 + $0x78] sm:$0xff] 0.0
        $region86: #{sccf_encoder_forward.1} parent=69 // pred_fallthru
          _
        %v537 = vld [vmem:[%s305] sm:$0xff]
        %v538 = vld [vmem:[%s305 + $0x8] sm:$0xff]
        %v539 = vld [vmem:[%s305 + $0x10] sm:$0xff]
        %v540 = vld [vmem:[%s305 + $0x18] sm:$0xff]
        %v541 = vunpack.c.l.s8.bf16 %v537
        %v542 = vunpack.c.h.s8.bf16 %v537
        %v543 = vunpack.c.l.s8.bf16 %v538
        %v544 = vunpack.c.h.s8.bf16 %v538
        %v545 = vunpack.c.l.s8.bf16 %v539
        %v546 = vunpack.c.h.s8.bf16 %v539
        %v547 = vunpack.c.l.s8.bf16 %v540
        %v548 = vunpack.c.h.s8.bf16 %v540
        %p549 = scmp.lt.s32.totalorder %s20, 0
        %s550 = ssub.s32 0, %s20
        %s551 = scalar_select %p549, %s550, %s20
        %s552 = sand.u32 %s551, 1
        %s553 = ssub.s32 0, %s552
        %s554 = scalar_select %p549, %s553, %s552
        %p555 = scmp.ne.s32.totalorder %s554, 0
        %p556 = scmp.lt.s32.totalorder %s554, 0
        %p557 = pnand %p556, %p555
        %p558 = pneg %p557
        %s559 = sadd.s32 %s554, 2
        %s560 = scalar_select %p558, %s559, %s554
        %s561 = smul.u32 %s560, 256
        %s562 = smul.u32 %s22, 128
        %s563 = sadd.s32 %s561, %s562
        %s564 = sshra.s32 %s563, 4
        %s565 = sand.u32 %s563, 15
        %s566 = smul.addr %s564, 8
        %s567 = scalar_lea.vmem [#allocation2], %s566
        %v568 = vld [vmem:[%s567] sm:$0xff]
        %v569 = vld [vmem:[%s567 + $0x8] sm:$0xff]
        %v570 = vld [vmem:[%s567 + $0x10] sm:$0xff]
        %v571 = vld [vmem:[%s567 + $0x18] sm:$0xff]
        %v572 = vld [vmem:[%s567 + $0x20] sm:$0xff]
        %v573 = vld [vmem:[%s567 + $0x28] sm:$0xff]
        %v574 = vld [vmem:[%s567 + $0x30] sm:$0xff]
        %v575 = vld [vmem:[%s567 + $0x38] sm:$0xff]
        %v576 = vld [vmem:[#allocation4] sm:$0xff]
        %v577 = vld [vmem:[#allocation4 + $0x8] sm:$0xff]
        %v578 = vld [vmem:[#allocation4 + $0x10] sm:$0xff]
        %v579 = vld [vmem:[#allocation4 + $0x18] sm:$0xff]
        %v580 = vld [vmem:[#allocation4 + $0x20] sm:$0xff]
        %v581 = vld [vmem:[#allocation4 + $0x28] sm:$0xff]
        %v582 = vld [vmem:[#allocation4 + $0x30] sm:$0xff]
        %v583 = vld [vmem:[#allocation4 + $0x38] sm:$0xff]
        %v584 = vld [vmem:[#allocation4 + $0x40] sm:$0xff]
        %v585 = vld [vmem:[#allocation4 + $0x48] sm:$0xff]
        %v586 = vld [vmem:[#allocation4 + $0x50] sm:$0xff]
        %v587 = vld [vmem:[#allocation4 + $0x58] sm:$0xff]
        %v588 = vld [vmem:[#allocation4 + $0x60] sm:$0xff]
        %v589 = vld [vmem:[#allocation4 + $0x68] sm:$0xff]
        %v590 = vld [vmem:[#allocation4 + $0x70] sm:$0xff]
        %v591 = vld [vmem:[#allocation4 + $0x78] sm:$0xff]
        %592 = vmatprep.subr.bf16.mxu0 0
        %593 = vmatpush1.bf16.msra.mxu0 %v568
        %594 = vmatprep.subr.bf16.mxu0 0
        %595 = vmatpush1.bf16.msra.mxu0 %v569
        %596 = vmatprep.subr.bf16.mxu0 0
        %597 = vmatpush1.bf16.msra.mxu0 %v570
        %598 = vmatprep.subr.bf16.mxu0 0
        %599 = vmatpush1.bf16.msra.mxu0 %v571
        %600 = vmatprep.subr.bf16.mxu0 0
        %601 = vmatpush1.bf16.msra.mxu0 %v572
        %602 = vmatprep.subr.bf16.mxu0 0
        %603 = vmatpush1.bf16.msra.mxu0 %v573
        %604 = vmatprep.subr.bf16.mxu0 0
        %605 = vmatpush1.bf16.msra.mxu0 %v574
        %606 = vmatprep.subr.bf16.mxu0 0
        %607 = vmatpush1.bf16.msra.mxu0 %v575
        %608 = vmatprep.subr.bf16.mxu0 0
        %609 = vmatpush1.bf16.msra.mxu0 0
        %610 = vmatprep.subr.bf16.mxu0 0
        %611 = vmatpush1.bf16.msra.mxu0 0
        %612 = vmatprep.subr.bf16.mxu0 0
        %613 = vmatpush1.bf16.msra.mxu0 0
        %614 = vmatprep.subr.bf16.mxu0 0
        %615 = vmatpush1.bf16.msra.mxu0 0
        %616 = vmatprep.subr.bf16.mxu0 0
        %617 = vmatpush1.bf16.msra.mxu0 0
        %618 = vmatprep.subr.bf16.mxu0 0
        %619 = vmatpush1.bf16.msra.mxu0 0
        %620 = vmatprep.subr.bf16.mxu0 0
        %621 = vmatpush1.bf16.msra.mxu0 0
        %622 = vmatprep.subr.bf16.mxu0 0
        %623 = vmatpush1.bf16.msra.mxu0 0
        %624 = vmatprep.mubr.bf16.mxu0 0
        %625 = vmatmul.mubr.bf16.gmra.mrb[0].mxu0 %v541
        %v626 = vpop.f32.mrb[0].mxu0
        %v627 = vadd.f32 0.0, %v626
        %v628 = vpop.f32.mrb[0].mxu0
        %v629 = vpop.f32.mrb[0].mxu0
        %v630 = vadd.f32 0.0, %v629
        %v631 = vpop.f32.mrb[0].mxu0
        %632 = vmatprep.mubr.bf16.mxu0 0
        %633 = vmatmul.mubr.bf16.gmra.mrb[0].mxu0 %v542
        %v634 = vpop.f32.mrb[0].mxu0
        %v635 = vadd.f32 0.0, %v634
        %v636 = vpop.f32.mrb[0].mxu0
        %v637 = vpop.f32.mrb[0].mxu0
        %v638 = vadd.f32 0.0, %v637
        %v639 = vpop.f32.mrb[0].mxu0
        %640 = vmatprep.mubr.bf16.mxu0 0
        %641 = vmatmul.mubr.bf16.gmra.mrb[0].mxu0 %v543
        %v642 = vpop.f32.mrb[0].mxu0
        %v643 = vadd.f32 0.0, %v642
        %v644 = vpop.f32.mrb[0].mxu0
        %v645 = vpop.f32.mrb[0].mxu0
        %v646 = vadd.f32 0.0, %v645
        %v647 = vpop.f32.mrb[0].mxu0
        %648 = vmatprep.mubr.bf16.mxu0 0
        %649 = vmatmul.mubr.bf16.gmra.mrb[0].mxu0 %v544
        %v650 = vpop.f32.mrb[0].mxu0
        %v651 = vadd.f32 0.0, %v650
        %v652 = vpop.f32.mrb[0].mxu0
        %v653 = vpop.f32.mrb[0].mxu0
        %v654 = vadd.f32 0.0, %v653
        %v655 = vpop.f32.mrb[0].mxu0
        %656 = vmatprep.mubr.bf16.mxu0 0
        %657 = vmatmul.mubr.bf16.gmra.mrb[0].mxu0 %v545
        %v658 = vpop.f32.mrb[0].mxu0
        %v659 = vadd.f32 0.0, %v658
        %v660 = vpop.f32.mrb[0].mxu0
        %v661 = vpop.f32.mrb[0].mxu0
        %v662 = vadd.f32 0.0, %v661
        %v663 = vpop.f32.mrb[0].mxu0
        %664 = vmatprep.mubr.bf16.mxu0 0
        %665 = vmatmul.mubr.bf16.gmra.mrb[0].mxu0 %v546
        %v666 = vpop.f32.mrb[0].mxu0
        %v667 = vadd.f32 0.0, %v666
        %v668 = vpop.f32.mrb[0].mxu0
        %v669 = vpop.f32.mrb[0].mxu0
        %v670 = vadd.f32 0.0, %v669
        %v671 = vpop.f32.mrb[0].mxu0
        %672 = vmatprep.mubr.bf16.mxu0 0
        %673 = vmatmul.mubr.bf16.gmra.mrb[0].mxu0 %v547
        %v674 = vpop.f32.mrb[0].mxu0
        %v675 = vadd.f32 0.0, %v674
        %v676 = vpop.f32.mrb[0].mxu0
        %v677 = vpop.f32.mrb[0].mxu0
        %v678 = vadd.f32 0.0, %v677
        %v679 = vpop.f32.mrb[0].mxu0
        %680 = vmatprep.mubr.bf16.mxu0 0
        %681 = vmatmul.mubr.bf16.gmra.mrb[0].mxu0 %v548
        %v682 = vpop.f32.mrb[0].mxu0
        %v683 = vadd.f32 0.0, %v682
        %v684 = vpop.f32.mrb[0].mxu0
        %v685 = vpop.f32.mrb[0].mxu0
        %v686 = vadd.f32 0.0, %v685
        %v687 = vpop.f32.mrb[0].mxu0
        %688 = vdwg.mxu0
        %v689 = vadd.f32 %v576, %v627
        %v690 = vadd.f32 %v577, %v630
        %v691 = vadd.f32 %v578, %v635
        %v692 = vadd.f32 %v579, %v638
        %v693 = vadd.f32 %v580, %v643
        %v694 = vadd.f32 %v581, %v646
        %v695 = vadd.f32 %v582, %v651
        %v696 = vadd.f32 %v583, %v654
        %v697 = vadd.f32 %v584, %v659
        %v698 = vadd.f32 %v585, %v662
        %v699 = vadd.f32 %v586, %v667
        %v700 = vadd.f32 %v587, %v670
        %v701 = vadd.f32 %v588, %v675
        %v702 = vadd.f32 %v589, %v678
        %v703 = vadd.f32 %v590, %v683
        %v704 = vadd.f32 %v591, %v686
        %705 = vst [vmem:[#allocation4] sm:$0xff] %v689
        %706 = vst [vmem:[#allocation4 + $0x8] sm:$0xff] %v690
        %707 = vst [vmem:[#allocation4 + $0x10] sm:$0xff] %v691
        %708 = vst [vmem:[#allocation4 + $0x18] sm:$0xff] %v692
        %709 = vst [vmem:[#allocation4 + $0x20] sm:$0xff] %v693
        %710 = vst [vmem:[#allocation4 + $0x28] sm:$0xff] %v694
        %711 = vst [vmem:[#allocation4 + $0x30] sm:$0xff] %v695
        %712 = vst [vmem:[#allocation4 + $0x38] sm:$0xff] %v696
        %713 = vst [vmem:[#allocation4 + $0x40] sm:$0xff] %v697
        %714 = vst [vmem:[#allocation4 + $0x48] sm:$0xff] %v698
        %715 = vst [vmem:[#allocation4 + $0x50] sm:$0xff] %v699
        %716 = vst [vmem:[#allocation4 + $0x58] sm:$0xff] %v700
        %717 = vst [vmem:[#allocation4 + $0x60] sm:$0xff] %v701
        %718 = vst [vmem:[#allocation4 + $0x68] sm:$0xff] %v702
        %719 = vst [vmem:[#allocation4 + $0x70] sm:$0xff] %v703
        %720 = vst [vmem:[#allocation4 + $0x78] sm:$0xff] %v704
        %p721 = scmp.eq.s32.totalorder %s22, 1
        // Predicated region
        $region87: #{sccf_encoder_forward.1} parent=69 // pred_check
          %p722 = pneg %p721
        $region88: #{sccf_encoder_forward.1} parent=69 // pred_check_branch
          %724 = sbr.rel (%p722) target = $region90
        $region89: #{sccf_encoder_forward.1} parent=69 // pred_region
          %v725 = vld [vmem:[%s357] sm:$0xff]
          %v726 = vld [vmem:[%s357 + $0x8] sm:$0xff]
          %v727 = vld [vmem:[%s357 + $0x10] sm:$0xff]
          %v728 = vld [vmem:[%s357 + $0x18] sm:$0xff]
          %v729 = vld [vmem:[%s357 + $0x20] sm:$0xff]
          %v730 = vld [vmem:[%s357 + $0x28] sm:$0xff]
          %v731 = vld [vmem:[%s357 + $0x30] sm:$0xff]
          %v732 = vld [vmem:[%s357 + $0x38] sm:$0xff]
          %v733 = vld [vmem:[%s357 + $0x40] sm:$0xff]
          %v734 = vld [vmem:[%s357 + $0x48] sm:$0xff]
          %v735 = vld [vmem:[%s357 + $0x50] sm:$0xff]
          %v736 = vld [vmem:[%s357 + $0x58] sm:$0xff]
          %v737 = vld [vmem:[%s357 + $0x60] sm:$0xff]
          %v738 = vld [vmem:[%s357 + $0x68] sm:$0xff]
          %v739 = vld [vmem:[%s357 + $0x70] sm:$0xff]
          %v740 = vld [vmem:[%s357 + $0x78] sm:$0xff]
          %v741 = vld [vmem:[#allocation4] sm:$0xff]
          %v742 = vld [vmem:[#allocation4 + $0x8] sm:$0xff]
          %v743 = vld [vmem:[#allocation4 + $0x10] sm:$0xff]
          %v744 = vld [vmem:[#allocation4 + $0x18] sm:$0xff]
          %v745 = vld [vmem:[#allocation4 + $0x20] sm:$0xff]
          %v746 = vld [vmem:[#allocation4 + $0x28] sm:$0xff]
          %v747 = vld [vmem:[#allocation4 + $0x30] sm:$0xff]
          %v748 = vld [vmem:[#allocation4 + $0x38] sm:$0xff]
          %v749 = vld [vmem:[#allocation4 + $0x40] sm:$0xff]
          %v750 = vld [vmem:[#allocation4 + $0x48] sm:$0xff]
          %v751 = vld [vmem:[#allocation4 + $0x50] sm:$0xff]
          %v752 = vld [vmem:[#allocation4 + $0x58] sm:$0xff]
          %v753 = vld [vmem:[#allocation4 + $0x60] sm:$0xff]
          %v754 = vld [vmem:[#allocation4 + $0x68] sm:$0xff]
          %v755 = vld [vmem:[#allocation4 + $0x70] sm:$0xff]
          %v756 = vld [vmem:[#allocation4 + $0x78] sm:$0xff]
          %758 = vset.pattern.permute.xlu0 0
          %759 = vperm.xlu0 %758, %v725
          %v760 = vpop.permute.xlu0 %759
          %763 = vset.pattern.permute.xlu0 0
          %764 = vperm.xlu0 %763, %v726
          %v765 = vpop.permute.xlu0 %764
          %768 = vset.pattern.permute.xlu0 0
          %769 = vperm.xlu0 %768, %v727
          %v770 = vpop.permute.xlu0 %769
          %773 = vset.pattern.permute.xlu0 0
          %774 = vperm.xlu0 %773, %v728
          %v775 = vpop.permute.xlu0 %774
          %778 = vset.pattern.permute.xlu0 0
          %779 = vperm.xlu0 %778, %v729
          %v780 = vpop.permute.xlu0 %779
          %783 = vset.pattern.permute.xlu0 0
          %784 = vperm.xlu0 %783, %v730
          %v785 = vpop.permute.xlu0 %784
          %788 = vset.pattern.permute.xlu0 0
          %789 = vperm.xlu0 %788, %v731
          %v790 = vpop.permute.xlu0 %789
          %793 = vset.pattern.permute.xlu0 0
          %794 = vperm.xlu0 %793, %v732
          %v795 = vpop.permute.xlu0 %794
          %798 = vset.pattern.permute.xlu0 0
          %799 = vperm.xlu0 %798, %v733
          %v800 = vpop.permute.xlu0 %799
          %803 = vset.pattern.permute.xlu0 0
          %804 = vperm.xlu0 %803, %v734
          %v805 = vpop.permute.xlu0 %804
          %808 = vset.pattern.permute.xlu0 0
          %809 = vperm.xlu0 %808, %v735
          %v810 = vpop.permute.xlu0 %809
          %813 = vset.pattern.permute.xlu0 0
          %814 = vperm.xlu0 %813, %v736
          %v815 = vpop.permute.xlu0 %814
          %818 = vset.pattern.permute.xlu0 0
          %819 = vperm.xlu0 %818, %v737
          %v820 = vpop.permute.xlu0 %819
          %823 = vset.pattern.permute.xlu0 0
          %824 = vperm.xlu0 %823, %v738
          %v825 = vpop.permute.xlu0 %824
          %828 = vset.pattern.permute.xlu0 0
          %829 = vperm.xlu0 %828, %v739
          %v830 = vpop.permute.xlu0 %829
          %833 = vset.pattern.permute.xlu0 0
          %834 = vperm.xlu0 %833, %v740
          %v835 = vpop.permute.xlu0 %834
          %v837 = vmul.f32 %v760, %v741
          %v838 = vmul.f32 %v765, %v742
          %v839 = vmul.f32 %v770, %v743
          %v840 = vmul.f32 %v775, %v744
          %v841 = vmul.f32 %v780, %v745
          %v842 = vmul.f32 %v785, %v746
          %v843 = vmul.f32 %v790, %v747
          %v844 = vmul.f32 %v795, %v748
          %v845 = vmul.f32 %v800, %v749
          %v846 = vmul.f32 %v805, %v750
          %v847 = vmul.f32 %v810, %v751
          %v848 = vmul.f32 %v815, %v752
          %v849 = vmul.f32 %v820, %v753
          %v850 = vmul.f32 %v825, %v754
          %v851 = vmul.f32 %v830, %v755
          %v852 = vmul.f32 %v835, %v756
          %s853 = smul.u32 %s21, 128
          %s854 = scalar_lea.vmem [#allocation3], %s853
          %v855 = vld [vmem:[%s854] sm:$0xff]
          %v856 = vld [vmem:[%s854 + $0x8] sm:$0xff]
          %v857 = vld [vmem:[%s854 + $0x10] sm:$0xff]
          %v858 = vld [vmem:[%s854 + $0x18] sm:$0xff]
          %v859 = vld [vmem:[%s854 + $0x20] sm:$0xff]
          %v860 = vld [vmem:[%s854 + $0x28] sm:$0xff]
          %v861 = vld [vmem:[%s854 + $0x30] sm:$0xff]
          %v862 = vld [vmem:[%s854 + $0x38] sm:$0xff]
          %v863 = vld [vmem:[%s854 + $0x40] sm:$0xff]
          %v864 = vld [vmem:[%s854 + $0x48] sm:$0xff]
          %v865 = vld [vmem:[%s854 + $0x50] sm:$0xff]
          %v866 = vld [vmem:[%s854 + $0x58] sm:$0xff]
          %v867 = vld [vmem:[%s854 + $0x60] sm:$0xff]
          %v868 = vld [vmem:[%s854 + $0x68] sm:$0xff]
          %v869 = vld [vmem:[%s854 + $0x70] sm:$0xff]
          %v870 = vld [vmem:[%s854 + $0x78] sm:$0xff]
          %v871 = vadd.f32 %v855, %v837
          %v872 = vadd.f32 %v856, %v838
          %v873 = vadd.f32 %v857, %v839
          %v874 = vadd.f32 %v858, %v840
          %v875 = vadd.f32 %v859, %v841
          %v876 = vadd.f32 %v860, %v842
          %v877 = vadd.f32 %v861, %v843
          %v878 = vadd.f32 %v862, %v844
          %v879 = vadd.f32 %v863, %v845
          %v880 = vadd.f32 %v864, %v846
          %v881 = vadd.f32 %v865, %v847
          %v882 = vadd.f32 %v866, %v848
          %v883 = vadd.f32 %v867, %v849
          %v884 = vadd.f32 %v868, %v850
          %v885 = vadd.f32 %v869, %v851
          %v886 = vadd.f32 %v870, %v852
          %887 = vst [vmem:[%s854] sm:$0xff] %v871
          %888 = vst [vmem:[%s854 + $0x8] sm:$0xff] %v872
          %889 = vst [vmem:[%s854 + $0x10] sm:$0xff] %v873
          %890 = vst [vmem:[%s854 + $0x18] sm:$0xff] %v874
          %891 = vst [vmem:[%s854 + $0x20] sm:$0xff] %v875
          %892 = vst [vmem:[%s854 + $0x28] sm:$0xff] %v876
          %893 = vst [vmem:[%s854 + $0x30] sm:$0xff] %v877
          %894 = vst [vmem:[%s854 + $0x38] sm:$0xff] %v878
          %895 = vst [vmem:[%s854 + $0x40] sm:$0xff] %v879
          %896 = vst [vmem:[%s854 + $0x48] sm:$0xff] %v880
          %897 = vst [vmem:[%s854 + $0x50] sm:$0xff] %v881
          %898 = vst [vmem:[%s854 + $0x58] sm:$0xff] %v882
          %899 = vst [vmem:[%s854 + $0x60] sm:$0xff] %v883
          %900 = vst [vmem:[%s854 + $0x68] sm:$0xff] %v884
          %901 = vst [vmem:[%s854 + $0x70] sm:$0xff] %v885
          %902 = vst [vmem:[%s854 + $0x78] sm:$0xff] %v886
          %s903 = sadd.s32 %s20, 1
          %p904 = scmp.lt.s32.totalorder %s903, 0
          %s905 = ssub.s32 0, %s903
          %s906 = scalar_select %p904, %s905, %s903
          %s907 = sand.u32 %s906, 1
          %s908 = ssub.s32 0, %s907
          %s909 = scalar_select %p904, %s908, %s907
          %p910 = scmp.ne.s32.totalorder %s909, 0
          %p911 = scmp.lt.s32.totalorder %s909, 0
          %p912 = pnand %p911, %p910
          %p913 = pneg %p912
          %s914 = sadd.s32 %s909, 2
          %s915 = scalar_select %p913, %s914, %s909
          %s916 = smul.u32 %s915, 256
          %s917 = sadd.s32 %s916, %s853
          %v918 = vmul.f32 %v760, %v837
          %v919 = vmul.f32 %v765, %v838
          %v920 = vmul.f32 %v770, %v839
          %v921 = vmul.f32 %v775, %v840
          %v922 = vmul.f32 %v780, %v841
          %v923 = vmul.f32 %v785, %v842
          %v924 = vmul.f32 %v790, %v843
          %v925 = vmul.f32 %v795, %v844
          %v926 = vmul.f32 %v800, %v845
          %v927 = vmul.f32 %v805, %v846
          %v928 = vmul.f32 %v810, %v847
          %v929 = vmul.f32 %v815, %v848
          %v930 = vmul.f32 %v820, %v849
          %v931 = vmul.f32 %v825, %v850
          %v932 = vmul.f32 %v830, %v851
          %v933 = vmul.f32 %v835, %v852
          %v934 = vpack.c.bf16 %v919, %v918
          %v935 = vpack.c.bf16 %v921, %v920
          %v936 = vpack.c.bf16 %v923, %v922
          %v937 = vpack.c.bf16 %v925, %v924
          %v938 = vpack.c.bf16 %v927, %v926
          %v939 = vpack.c.bf16 %v929, %v928
          %v940 = vpack.c.bf16 %v931, %v930
          %v941 = vpack.c.bf16 %v933, %v932
          %s942 = sshra.s32 %s917, 4
          %s943 = sand.u32 %s917, 15
          %s944 = smul.addr %s942, 8
          %s945 = scalar_lea.vmem [#allocation2], %s944
          %946 = vst [vmem:[%s945] sm:$0xff] %v934
          %947 = vst [vmem:[%s945 + $0x8] sm:$0xff] %v935
          %948 = vst [vmem:[%s945 + $0x10] sm:$0xff] %v936
          %949 = vst [vmem:[%s945 + $0x18] sm:$0xff] %v937
          %950 = vst [vmem:[%s945 + $0x20] sm:$0xff] %v938
          %951 = vst [vmem:[%s945 + $0x28] sm:$0xff] %v939
          %952 = vst [vmem:[%s945 + $0x30] sm:$0xff] %v940
          %953 = vst [vmem:[%s945 + $0x38] sm:$0xff] %v941
          %p954 = scmp.eq.s32.totalorder %s20, 1
          // Predicated region
          $region91: #{sccf_encoder_forward.1} parent=89 // pred_check
            %p955 = pneg %p954
          $region92: #{sccf_encoder_forward.1} parent=89 // pred_check_branch
            %957 = sbr.rel (%p955) target = $region94
          $region93: #{sccf_encoder_forward.1} parent=89 // pred_region
            %v958 = vmul.f32 %v871, 0.33333334
            %v959 = vmul.f32 %v872, 0.33333334
            %v960 = vmul.f32 %v873, 0.33333334
            %v961 = vmul.f32 %v874, 0.33333334
            %v962 = vmul.f32 %v875, 0.33333334
            %v963 = vmul.f32 %v876, 0.33333334
            %v964 = vmul.f32 %v877, 0.33333334
            %v965 = vmul.f32 %v878, 0.33333334
            %v966 = vmul.f32 %v879, 0.33333334
            %v967 = vmul.f32 %v880, 0.33333334
            %v968 = vmul.f32 %v881, 0.33333334
            %v969 = vmul.f32 %v882, 0.33333334
            %v970 = vmul.f32 %v883, 0.33333334
            %v971 = vmul.f32 %v884, 0.33333334
            %v972 = vmul.f32 %v885, 0.33333334
            %v973 = vmul.f32 %v886, 0.33333334
            %974 = vst [vmem:[%s391] sm:$0xff] %v958
            %975 = vst [vmem:[%s391 + $0x8] sm:$0xff] %v959
            %976 = vst [vmem:[%s391 + $0x10] sm:$0xff] %v960
            %977 = vst [vmem:[%s391 + $0x18] sm:$0xff] %v961
            %978 = vst [vmem:[%s391 + $0x20] sm:$0xff] %v962
            %979 = vst [vmem:[%s391 + $0x28] sm:$0xff] %v963
            %980 = vst [vmem:[%s391 + $0x30] sm:$0xff] %v964
            %981 = vst [vmem:[%s391 + $0x38] sm:$0xff] %v965
            %982 = vst [vmem:[%s391 + $0x40] sm:$0xff] %v966
            %983 = vst [vmem:[%s391 + $0x48] sm:$0xff] %v967
            %984 = vst [vmem:[%s391 + $0x50] sm:$0xff] %v968
            %985 = vst [vmem:[%s391 + $0x58] sm:$0xff] %v969
            %986 = vst [vmem:[%s391 + $0x60] sm:$0xff] %v970
            %987 = vst [vmem:[%s391 + $0x68] sm:$0xff] %v971
            %988 = vst [vmem:[%s391 + $0x70] sm:$0xff] %v972
            %989 = vst [vmem:[%s391 + $0x78] sm:$0xff] %v973
          $region94: #{sccf_encoder_forward.1} parent=89 // pred_fallthru
            _
        $region90: #{sccf_encoder_forward.1} parent=69 // pred_fallthru
          _
        %p990 = scmp.eq.s32.totalorder %s20, 1
        %s991 = scalar_select %p990, %s21, 0
        %s992 = smul.u32 16, %s991
        %p993 = scmp.lt.s32.totalorder %s992, 31
        %s994 = scalar_select %p993, %s992, 31
        %s995 = smul.addr %s994, 8
        %s996 = scalar_lea.vmem %s4, %s995
        // Predicated region
        $region95: #{sccf_encoder_forward.1} parent=69 // pred_check
          %p997 = pneg %p176
        $region96: #{sccf_encoder_forward.1} parent=69 // pred_check_branch
          %999 = sbr.rel (%p997) target = $region98
        $region97: #{sccf_encoder_forward.1} parent=69 // pred_region
          %p1000 = scmp.eq.s32.totalorder %s20, 1
          %s1001 = scalar_select %p1000, %s21, 0
          %s1002 = smul.u32 16, %s1001
        $region98: #{sccf_encoder_forward.1} parent=69 // pred_fallthru
          _
      $region70: #{sccf_encoder_forward.1} parent=5 // pred_fallthru
        _
      %p1003 = scmp.le.s32.totalorder 2, %s10
      // Predicated region
      $region99: #{sccf_encoder_forward.1} parent=5 // pred_check
        %p1004 = pneg %p1003
      $region100: #{sccf_encoder_forward.1} parent=5 // pred_check_branch
        %1006 = sbr.rel (%p1004) target = $region102
      $region101: #{sccf_encoder_forward.1} parent=5 // pred_region
        %s1007 = ssub.s32 %s10, 2
        // Predicated region
        $region103: #{sccf_encoder_forward.1} parent=101 // pred_check
          %p1008 = pneg %p182
        $region104: #{sccf_encoder_forward.1} parent=101 // pred_check_branch
          %1010 = sbr.rel (%p1008) target = $region106
        $region105: #{sccf_encoder_forward.1} parent=101 // pred_region
          %p1011 = scmp.eq.s32.totalorder %s23, 1
          %s1012 = scalar_select %p1011, %s24, 0
          %s1013 = smul.u32 16, %s1012
          %p1014 = scmp.lt.s32.totalorder %s1013, 31
          %s1015 = scalar_select %p1014, %s1013, 31
          %s1016 = smul.addr %s1015, 8
          %s1017 = scalar_lea.vmem %s4, %s1016
        $region106: #{sccf_encoder_forward.1} parent=101 // pred_fallthru
          _
      $region102: #{sccf_encoder_forward.1} parent=5 // pred_fallthru
        _
    $region6: #{sccf_encoder_forward.1} parent=1 // loop_footer
      %s14 = sadd.s32 1, %s10
    $region7: #{sccf_encoder_forward.1} parent=1 // loop_footer_branch
      %9 = sbr.rel target = $region3
    $region8: #{sccf_encoder_forward.1} parent=1 // loop_exit
      _

</llo_original>
